<compile_context>
chip_gen: v7x
topology: tpu7x:2x2x1
jax: 0.10.0
libtpu: 0.0.40
codegen_flags: <defaults>
</compile_context>

<pallas_src>
import jax
import jax.numpy as jnp
from jax.experimental import pallas as pl
from jax.experimental.pallas import tpu as pltpu

_LANES = 128
_NEG_BIG = -1e30  # pad-column bias: exp(shifted) underflows to exactly 0 (f32/bf16 safe)


def _round_up(x, m):
    return ((x + m - 1) // m) * m


def mclr_kernel(x_ref, w_ref, b_ref, o_ref):
    # x_ref: [TB, K], w_ref: [K, N_pad], b_ref: [1, N_pad], o_ref: [TB, N_pad]
    # Padded output columns carry a -1e30 bias, so they self-mask in the
    # log-sum-exp; no explicit masking needed.
    logits = jnp.dot(x_ref[...], w_ref[...], preferred_element_type=jnp.float32)
    logits = logits + b_ref[...]                              # VPU add, hidden under DMA
    m = jnp.max(logits, axis=-1, keepdims=True)               # pad cols never win
    shifted = logits - m
    lse = jnp.log(jnp.sum(jnp.exp(shifted), axis=-1, keepdims=True))
    o_ref[...] = (shifted - lse).astype(o_ref.dtype)


def mclr_forward(x, weight, bias, *, block_b=1024, trim=False):
    """Forward pass of MCLR: log_softmax(flatten(x) @ W.T + b).

    x: [B, ...] flattening to 784, weight: [10, 784], bias: [10].
    Returns padded [B, 128] log-probs (valid data in cols 0..9) unless
    trim=True, in which case the [B, 10] slice is returned (extra XLA op;
    prefer slicing at the consumer so it can fuse).
    """
    B = x.shape[0]
    x_flat = x.reshape(B, -1)                         # torch.flatten(x, 1)
    K = x_flat.shape[1]                               # 784
    N = weight.shape[0]                               # 10
    N_pad = _round_up(N, _LANES)                      # 128

    # Keep bf16 inputs as-is (halves the dominant x HBM read); otherwise f32.
    if x_flat.dtype not in (jnp.bfloat16, jnp.float32):
        x_flat = x_flat.astype(jnp.float32)
    compute_dtype = x_flat.dtype
    x_itemsize = jnp.dtype(compute_dtype).itemsize
    out_dtype = compute_dtype                         # bf16 in -> bf16 log-probs
    out_itemsize = jnp.dtype(out_dtype).itemsize

    # Weight [K, N_pad]: W^T in cols 0..9, zeros in pad cols (tiny, one-time).
    w_full = jnp.zeros((K, N_pad), compute_dtype)
    w_full = w_full.at[:, :N].set(weight.T.astype(compute_dtype))

    # Bias row [1, N_pad] in f32: real bias, -1e30 on pad cols (self-masking).
    bias_row = jnp.full((1, N_pad), _NEG_BIG, dtype=jnp.float32)
    bias_row = bias_row.at[0, :N].set(bias.astype(jnp.float32))

    # Batch tile: multiple of 8; cap so large B gives >= 4 grid steps
    # (2 per TensorCore on v7x, with double-buffered prefetch).
    TB_target = _round_up(block_b, 8)
    TB_cap = _round_up(pl.cdiv(B, 4), 8)
    TB = max(8, min(TB_target, TB_cap, _round_up(B, 8)))
    grid = (pl.cdiv(B, TB),)                          # partial last block handled by Pallas

    # VMEM footprint estimate (double-buffered x & out, resident-ish W + bias).
    vmem_need = (2 * TB * K * x_itemsize
                 + 2 * TB * N_pad * out_itemsize
                 + 2 * K * N_pad * x_itemsize
                 + 2 * N_pad * 4)
    vmem_limit = None
    if vmem_need > (16 << 20):                        # beyond v5e's default scoped limit
        vmem_limit = min(vmem_need + (4 << 20), 48 << 20)

    out = pl.pallas_call(
        mclr_kernel,
        out_shape=jax.ShapeDtypeStruct((B, N_pad), out_dtype),
        grid_spec=pl.GridSpec(
            grid=grid,
            in_specs=[
                pl.BlockSpec((TB, K), lambda i: (i, 0)),        # x tiles stream
                pl.BlockSpec((K, N_pad), lambda i: (0, 0)),     # W stays resident
                pl.BlockSpec((1, N_pad), lambda i: (0, 0)),     # bias row (tiny)
            ],
            out_specs=pl.BlockSpec((TB, N_pad), lambda i: (i, 0)),
        ),
        compiler_params=pltpu.CompilerParams(
            dimension_semantics=("parallel",),
            vmem_limit_bytes=vmem_limit,
        ),
        cost_estimate=pl.CostEstimate(
            flops=2 * B * K * N_pad,
            transcendentals=B * N_pad,
            bytes_accessed=(B * K * x_itemsize
                            + K * N_pad * x_itemsize
                            + N_pad * 4
                            + B * N_pad * out_itemsize),
        ),
    )(x_flat, w_full, bias_row)

    if trim:
        return out[:, :N]
    return out


def init_params(key):
    # nn.Linear(784, 10) with xavier_uniform_ on weight; bias keeps PyTorch's
    # default U(-1/sqrt(fan_in), 1/sqrt(fan_in)) init.
    k_w, k_b = jax.random.split(key)
    fan_in, fan_out = 784, 10
    bound_w = (6.0 / (fan_in + fan_out)) ** 0.5
    weight = jax.random.uniform(k_w, (fan_out, fan_in), jnp.float32,
                                minval=-bound_w, maxval=bound_w)
    bound_b = 1.0 / (fan_in ** 0.5)
    bias = jax.random.uniform(k_b, (fan_out,), jnp.float32,
                              minval=-bound_b, maxval=bound_b)
    return weight, bias


if __name__ == "__main__":
    key = jax.random.PRNGKey(0)
    k_x, k_p = jax.random.split(key)
    # MNIST-like input: batch=8, NCHW [8, 1, 28, 28] -> flattens to 784.
    x = jax.random.normal(k_x, (8, 1, 28, 28), jnp.float32)
    weight, bias = init_params(k_p)

    out_padded = mclr_forward(x, weight, bias)        # [8, 128] log-probs, padded
    jax.block_until_ready(out_padded)
    out = out_padded[:, :10]                          # consumer-side slice

    # sanity check against plain-JAX reference
    logits_ref = x.reshape(8, -1) @ weight.T + bias
    ref = jax.nn.log_softmax(logits_ref, axis=1)
    assert out.shape == (8, 10)
    assert jnp.allclose(out, ref, atol=1e-4), "mismatch vs reference"
    print("KERNEL_OK")
</pallas_src>

<mosaic_0001>
module attributes {stable_mosaic.version = 11 : i64} {
  func.func @mclr_kernel(%arg0: i32, %arg1: memref<8x784xf32, #tpu.memory_space<vmem>>, %arg2: memref<784x128xf32, #tpu.memory_space<vmem>>, %arg3: memref<1x128xf32, #tpu.memory_space<vmem>>, %arg4: memref<8x128xf32, #tpu.memory_space<vmem>>) attributes {dimension_semantics = [#tpu.dimension_semantics<parallel>], iteration_bounds = array<i64: 1>, scalar_prefetch = 0 : i64, scratch_operands = 0 : i64, tpu.core_type = #tpu.core_type<tc>, window_params = [{transform_indices = @transform_0, window_bounds = array<i64: 8, 784>}, {pipeline_mode = #tpu.pipeline_mode<synchronous>, transform_indices = @transform_1, window_bounds = array<i64: 784, 128>}, {pipeline_mode = #tpu.pipeline_mode<synchronous>, transform_indices = @transform_2, window_bounds = array<i64: 1, 128>}, {transform_indices = @transform_3, window_bounds = array<i64: 8, 128>}]} {
    %c0 = arith.constant 0 : index
    %c0_0 = arith.constant 0 : index
    %0 = vector.load %arg1[%c0, %c0_0] : memref<8x784xf32, #tpu.memory_space<vmem>>, vector<8x784xf32>
    %c0_1 = arith.constant 0 : index
    %c0_2 = arith.constant 0 : index
    %1 = vector.load %arg2[%c0_1, %c0_2] : memref<784x128xf32, #tpu.memory_space<vmem>>, vector<784x128xf32>
    %cst = arith.constant dense<0.000000e+00> : vector<8x128xf32>
    %2 = tpu.matmul %0, %1, %cst {dimension_numbers = #tpu.dot_dimension_numbers<[1], [0], [0], [1], [0, 0, 1, 1], [], []>} : vector<8x784xf32>, vector<784x128xf32>, vector<8x128xf32> -> vector<8x128xf32>
    %c0_3 = arith.constant 0 : index
    %c0_4 = arith.constant 0 : index
    %3 = vector.load %arg3[%c0_3, %c0_4] : memref<1x128xf32, #tpu.memory_space<vmem>>, vector<1x128xf32>
    %4 = vector.broadcast %3 : vector<1x128xf32> to vector<8x128xf32>
    %5 = arith.addf %2, %4 : vector<8x128xf32>
    %cst_5 = arith.constant dense<0xFF800000> : vector<8xf32>
    %6 = vector.multi_reduction <maximumf>, %5, %cst_5 [1] : vector<8x128xf32> to vector<8xf32>
    %7 = vector.shape_cast %6 : vector<8xf32> to vector<8x1xf32>
    %8 = vector.broadcast %7 : vector<8x1xf32> to vector<8x128xf32>
    %9 = arith.subf %5, %8 : vector<8x128xf32>
    %10 = math.exp %9 : vector<8x128xf32>
    %cst_6 = arith.constant dense<0.000000e+00> : vector<8xf32>
    %11 = vector.multi_reduction <add>, %10, %cst_6 [1] : vector<8x128xf32> to vector<8xf32>
    %12 = vector.shape_cast %11 : vector<8xf32> to vector<8x1xf32>
    %13 = math.log %12 : vector<8x1xf32>
    %14 = vector.broadcast %13 : vector<8x1xf32> to vector<8x128xf32>
    %15 = arith.subf %9, %14 : vector<8x128xf32>
    %c0_7 = arith.constant 0 : index
    %c0_8 = arith.constant 0 : index
    %16 = vector.load %arg4[%c0_7, %c0_8] : memref<8x128xf32, #tpu.memory_space<vmem>>, vector<8x128xf32>
    tpu.vector_store %arg4[%c0_7, %c0_8], %15 {strides = array<i32>} : memref<8x128xf32, #tpu.memory_space<vmem>>, vector<8x128xf32>,
    return
  }
  func.func @transform_0(%arg0: i32) -> (i32, i32) {
    %c0_i32 = arith.constant 0 : i32
    %c0_i32_0 = arith.constant 0 : i32
    return %arg0, %c0_i32 : i32, i32
  }
  func.func @transform_1(%arg0: i32) -> (i32, i32) {
    %c0_i32 = arith.constant 0 : i32
    %c0_i32_0 = arith.constant 0 : i32
    %c0_i32_1 = arith.constant 0 : i32
    return %c0_i32, %c0_i32_0 : i32, i32
  }
  func.func @transform_2(%arg0: i32) -> (i32, i32) {
    %c0_i32 = arith.constant 0 : i32
    %c0_i32_0 = arith.constant 0 : i32
    %c0_i32_1 = arith.constant 0 : i32
    return %c0_i32, %c0_i32_0 : i32, i32
  }
  func.func @transform_3(%arg0: i32) -> (i32, i32) {
    %c0_i32 = arith.constant 0 : i32
    %c0_i32_0 = arith.constant 0 : i32
    return %arg0, %c0_i32 : i32, i32
  }
}

</mosaic_0001>

<llo_original>
// kernel: tpu_custom_call.1
$region0: #{tpu_custom_call.1}
  #allocation0 [shape = 'u32[]', space=smem, size = 0x4, offset = 0x4, fixed_abs, tag = 'smem constant byte address 0x4 - core index']
  #allocation1 [shape = 'u32[144,128]{1,0:T(1,128)}', space=vmem, size = 0x12000, scoped, tag = 'internal scratch']
  %s0 = inlined_call_operand.hbm [shape: f32[8,784], index: 0, kind: input, shape index: {}]
  %s1 = inlined_call_operand.hbm [shape: f32[784,128], index: 1, kind: input, shape index: {}]
  %s2 = inlined_call_operand.vmem [shape: f32[1,128], index: 2, kind: input, shape index: {}]
  %s3 = inlined_call_operand.hbm [shape: f32[8,128], index: 3, kind: output, shape index: {}]
  %s4 = sld [smem:[#allocation0]]
  $region30: #{tpu_custom_call.1} parent=0
    _
  %s6 = ssub.s32 1, %s4
  %s7 = scalar_select 0, %s6, %s4
  $region1: #{tpu_custom_call.1} parent=0
    #allocation2 [shape = 'u8[28672]{0}', space=vmem, size = 0x7000, scoped, tag = 'input window, operand 0, single buffered']
    #allocation3 [shape = 's32[1]{0}', space=sflag, size = 0x4, scoped, tag = 'scoped memory for tpu_custom_call.1']
    #allocation4 [shape = 's32[1]{0}', space=sflag, size = 0x4, scoped, tag = 'scoped memory for tpu_custom_call.1']
    #allocation5 [shape = 'u8[401408]{0}', space=vmem, size = 0x62000, scoped, tag = 'input window, operand 1, single buffered']
    #allocation6 [shape = 's32[1]{0}', space=sflag, size = 0x4, scoped, tag = 'scoped memory for tpu_custom_call.1']
    #allocation7 [shape = 'u8[4096]{0}', space=vmem, size = 0x1000, scoped, tag = 'output window, operand 0, single buffered']
    %8 = vsyncpa [#allocation3], 0
    %9 = vsyncpa [#allocation6], 0
    %10 = vsyncpa [#allocation4], 0
    // Predicated region
    $region2: #{tpu_custom_call.1} parent=1 // pred_check
      _
    $region3: #{tpu_custom_call.1} parent=1 // pred_check_branch
      %12 = sbr.rel (0) target = $region5
    $region4: #{tpu_custom_call.1} parent=1 // pred_region
      %s14 = ssub.s32 896, 896
      %15 = vsyncadd [#allocation3], %s14
      %s17 = sshll.u32 [#allocation2], 4
      %s18 = int_to_ptr.vmem [resolvable:$true] %s17
      %20 = dma.hbm_to_vmem [thread:$0]  %s0, 896, %s18, [#allocation3]
    $region5: #{tpu_custom_call.1} parent=1 // pred_fallthru
      _
    // Predicated region
    $region6: #{tpu_custom_call.1} parent=1 // pred_check
      _
    $region7: #{tpu_custom_call.1} parent=1 // pred_check_branch
      %22 = sbr.rel (0) target = $region9
    $region8: #{tpu_custom_call.1} parent=1 // pred_region
      %s24 = ssub.s32 12544, 12544
      %25 = vsyncadd [#allocation6], %s24
      %s26 = sshll.u32 [#allocation5], 4
      %s27 = int_to_ptr.vmem [resolvable:$true] %s26
      %32 = dma.hbm_to_vmem [thread:$0]  %s1, 12544, %s27, [#allocation6], 128, 128, 8
    $region9: #{tpu_custom_call.1} parent=1 // pred_fallthru
      _
    // Predicated region
    $region10: #{tpu_custom_call.1} parent=1 // pred_check
      _
    $region11: #{tpu_custom_call.1} parent=1 // pred_check_branch
      %34 = sbr.rel (0) target = $region13
    $region12: #{tpu_custom_call.1} parent=1 // pred_region
      _
    $region13: #{tpu_custom_call.1} parent=1 // pred_fallthru
      _
    // Predicated region
    $region14: #{tpu_custom_call.1} parent=1 // pred_check
      _
    $region15: #{tpu_custom_call.1} parent=1 // pred_check_branch
      %36 = sbr.rel (0) target = $region17
    $region16: #{tpu_custom_call.1} parent=1 // pred_region
      %37 = dma.done [#allocation3], 896
    $region17: #{tpu_custom_call.1} parent=1 // pred_fallthru
      _
    // Predicated region
    $region18: #{tpu_custom_call.1} parent=1 // pred_check
      _
    $region19: #{tpu_custom_call.1} parent=1 // pred_check_branch
      %39 = sbr.rel (0) target = $region21
    $region20: #{tpu_custom_call.1} parent=1 // pred_region
      %40 = dma.done [#allocation6], 12544
    $region21: #{tpu_custom_call.1} parent=1 // pred_fallthru
      _
    %v41 = vld [vmem:[#allocation2] sm:$0xff]
    %v42 = vld [vmem:[#allocation2 + $0x8] sm:$0xff]
    %v43 = vld [vmem:[#allocation2 + $0x10] sm:$0xff]
    %v44 = vld [vmem:[#allocation2 + $0x18] sm:$0xff]
    %v45 = vld [vmem:[#allocation2 + $0x20] sm:$0xff]
    %v46 = vld [vmem:[#allocation2 + $0x28] sm:$0xff]
    %v47 = vld [vmem:[#allocation2 + $0x30] sm:$0xff]
    %v48 = vld [vmem:[#allocation5] sm:$0xff]
    %v49 = vld [vmem:[#allocation5 + $0x8] sm:$0xff]
    %v50 = vld [vmem:[#allocation5 + $0x10] sm:$0xff]
    %v51 = vld [vmem:[#allocation5 + $0x18] sm:$0xff]
    %v52 = vld [vmem:[#allocation5 + $0x20] sm:$0xff]
    %v53 = vld [vmem:[#allocation5 + $0x28] sm:$0xff]
    %v54 = vld [vmem:[#allocation5 + $0x30] sm:$0xff]
    %v55 = vld [vmem:[#allocation5 + $0x38] sm:$0xff]
    %v56 = vld [vmem:[#allocation5 + $0x40] sm:$0xff]
    %v57 = vld [vmem:[#allocation5 + $0x48] sm:$0xff]
    %v58 = vld [vmem:[#allocation5 + $0x50] sm:$0xff]
    %v59 = vld [vmem:[#allocation5 + $0x58] sm:$0xff]
    %v60 = vld [vmem:[#allocation5 + $0x60] sm:$0xff]
    %v61 = vld [vmem:[#allocation5 + $0x68] sm:$0xff]
    %v62 = vld [vmem:[#allocation5 + $0x70] sm:$0xff]
    %v63 = vld [vmem:[#allocation5 + $0x78] sm:$0xff]
    %v64 = vld [vmem:[#allocation5 + $0x80] sm:$0xff]
    %v65 = vld [vmem:[#allocation5 + $0x88] sm:$0xff]
    %v66 = vld [vmem:[#allocation5 + $0x90] sm:$0xff]
    %v67 = vld [vmem:[#allocation5 + $0x98] sm:$0xff]
    %v68 = vld [vmem:[#allocation5 + $0xa0] sm:$0xff]
    %v69 = vld [vmem:[#allocation5 + $0xa8] sm:$0xff]
    %v70 = vld [vmem:[#allocation5 + $0xb0] sm:$0xff]
    %v71 = vld [vmem:[#allocation5 + $0xb8] sm:$0xff]
    %v72 = vld [vmem:[#allocation5 + $0xc0] sm:$0xff]
    %v73 = vld [vmem:[#allocation5 + $0xc8] sm:$0xff]
    %v74 = vld [vmem:[#allocation5 + $0xd0] sm:$0xff]
    %v75 = vld [vmem:[#allocation5 + $0xd8] sm:$0xff]
    %v76 = vld [vmem:[#allocation5 + $0xe0] sm:$0xff]
    %v77 = vld [vmem:[#allocation5 + $0xe8] sm:$0xff]
    %v78 = vld [vmem:[#allocation5 + $0xf0] sm:$0xff]
    %v79 = vld [vmem:[#allocation5 + $0xf8] sm:$0xff]
    %v80 = vld [vmem:[#allocation5 + $0x100] sm:$0xff]
    %v81 = vld [vmem:[#allocation5 + $0x108] sm:$0xff]
    %v82 = vld [vmem:[#allocation5 + $0x110] sm:$0xff]
    %v83 = vld [vmem:[#allocation5 + $0x118] sm:$0xff]
    %v84 = vld [vmem:[#allocation5 + $0x120] sm:$0xff]
    %v85 = vld [vmem:[#allocation5 + $0x128] sm:$0xff]
    %v86 = vld [vmem:[#allocation5 + $0x130] sm:$0xff]
    %v87 = vld [vmem:[#allocation5 + $0x138] sm:$0xff]
    %v88 = vld [vmem:[#allocation5 + $0x140] sm:$0xff]
    %v89 = vld [vmem:[#allocation5 + $0x148] sm:$0xff]
    %v90 = vld [vmem:[#allocation5 + $0x150] sm:$0xff]
    %v91 = vld [vmem:[#allocation5 + $0x158] sm:$0xff]
    %v92 = vld [vmem:[#allocation5 + $0x160] sm:$0xff]
    %v93 = vld [vmem:[#allocation5 + $0x168] sm:$0xff]
    %v94 = vld [vmem:[#allocation5 + $0x170] sm:$0xff]
    %v95 = vld [vmem:[#allocation5 + $0x178] sm:$0xff]
    %v96 = vld [vmem:[#allocation5 + $0x180] sm:$0xff]
    %v97 = vld [vmem:[#allocation5 + $0x188] sm:$0xff]
    %v98 = vld [vmem:[#allocation5 + $0x190] sm:$0xff]
    %v99 = vld [vmem:[#allocation5 + $0x198] sm:$0xff]
    %v100 = vld [vmem:[#allocation5 + $0x1a0] sm:$0xff]
    %v101 = vld [vmem:[#allocation5 + $0x1a8] sm:$0xff]
    %v102 = vld [vmem:[#allocation5 + $0x1b0] sm:$0xff]
    %v103 = vld [vmem:[#allocation5 + $0x1b8] sm:$0xff]
    %v104 = vld [vmem:[#allocation5 + $0x1c0] sm:$0xff]
    %v105 = vld [vmem:[#allocation5 + $0x1c8] sm:$0xff]
    %v106 = vld [vmem:[#allocation5 + $0x1d0] sm:$0xff]
    %v107 = vld [vmem:[#allocation5 + $0x1d8] sm:$0xff]
    %v108 = vld [vmem:[#allocation5 + $0x1e0] sm:$0xff]
    %v109 = vld [vmem:[#allocation5 + $0x1e8] sm:$0xff]
    %v110 = vld [vmem:[#allocation5 + $0x1f0] sm:$0xff]
    %v111 = vld [vmem:[#allocation5 + $0x1f8] sm:$0xff]
    %v112 = vld [vmem:[#allocation5 + $0x200] sm:$0xff]
    %v113 = vld [vmem:[#allocation5 + $0x208] sm:$0xff]
    %v114 = vld [vmem:[#allocation5 + $0x210] sm:$0xff]
    %v115 = vld [vmem:[#allocation5 + $0x218] sm:$0xff]
    %v116 = vld [vmem:[#allocation5 + $0x220] sm:$0xff]
    %v117 = vld [vmem:[#allocation5 + $0x228] sm:$0xff]
    %v118 = vld [vmem:[#allocation5 + $0x230] sm:$0xff]
    %v119 = vld [vmem:[#allocation5 + $0x238] sm:$0xff]
    %v120 = vld [vmem:[#allocation5 + $0x240] sm:$0xff]
    %v121 = vld [vmem:[#allocation5 + $0x248] sm:$0xff]
    %v122 = vld [vmem:[#allocation5 + $0x250] sm:$0xff]
    %v123 = vld [vmem:[#allocation5 + $0x258] sm:$0xff]
    %v124 = vld [vmem:[#allocation5 + $0x260] sm:$0xff]
    %v125 = vld [vmem:[#allocation5 + $0x268] sm:$0xff]
    %v126 = vld [vmem:[#allocation5 + $0x270] sm:$0xff]
    %v127 = vld [vmem:[#allocation5 + $0x278] sm:$0xff]
    %v128 = vld [vmem:[#allocation5 + $0x280] sm:$0xff]
    %v129 = vld [vmem:[#allocation5 + $0x288] sm:$0xff]
    %v130 = vld [vmem:[#allocation5 + $0x290] sm:$0xff]
    %v131 = vld [vmem:[#allocation5 + $0x298] sm:$0xff]
    %v132 = vld [vmem:[#allocation5 + $0x2a0] sm:$0xff]
    %v133 = vld [vmem:[#allocation5 + $0x2a8] sm:$0xff]
    %v134 = vld [vmem:[#allocation5 + $0x2b0] sm:$0xff]
    %v135 = vld [vmem:[#allocation5 + $0x2b8] sm:$0xff]
    %v136 = vld [vmem:[#allocation5 + $0x2c0] sm:$0xff]
    %v137 = vld [vmem:[#allocation5 + $0x2c8] sm:$0xff]
    %v138 = vld [vmem:[#allocation5 + $0x2d0] sm:$0xff]
    %v139 = vld [vmem:[#allocation5 + $0x2d8] sm:$0xff]
    %v140 = vld [vmem:[#allocation5 + $0x2e0] sm:$0xff]
    %v141 = vld [vmem:[#allocation5 + $0x2e8] sm:$0xff]
    %v142 = vld [vmem:[#allocation5 + $0x2f0] sm:$0xff]
    %v143 = vld [vmem:[#allocation5 + $0x2f8] sm:$0xff]
    %v144 = vld [vmem:[#allocation5 + $0x300] sm:$0xff]
    %v145 = vld [vmem:[#allocation5 + $0x308] sm:$0xff]
    %v146 = vld [vmem:[%s2] sm:$0x1]
    %v148 = vlaneseq
    %v149 = vshrl.u32 %v148, 7
    %v150 = vsub.s32 0, %v149
    %v151 = vrot.slane %v146, %v150
    %vm153 = vcmask 130048
    %v155 = vsel %vm153, %v47, 0
    %157 = vmatprep.subr.mxu0 0.0
    %158 = vmatpush1.msra.mxu0 %v48
    %159 = vmatprep.subr.mxu0 0.0
    %160 = vmatpush1.msra.mxu0 %v49
    %161 = vmatprep.subr.mxu0 0.0
    %162 = vmatpush1.msra.mxu0 %v50
    %163 = vmatprep.subr.mxu0 0.0
    %164 = vmatpush1.msra.mxu0 %v51
    %165 = vmatprep.subr.mxu0 0.0
    %166 = vmatpush1.msra.mxu0 %v52
    %167 = vmatprep.subr.mxu0 0.0
    %168 = vmatpush1.msra.mxu0 %v53
    %169 = vmatprep.subr.mxu0 0.0
    %170 = vmatpush1.msra.mxu0 %v54
    %171 = vmatprep.subr.mxu0 0.0
    %172 = vmatpush1.msra.mxu0 %v55
    %173 = vmatprep.subr.mxu0 0.0
    %174 = vmatpush1.msra.mxu0 %v56
    %175 = vmatprep.subr.mxu0 0.0
    %176 = vmatpush1.msra.mxu0 %v57
    %177 = vmatprep.subr.mxu0 0.0
    %178 = vmatpush1.msra.mxu0 %v58
    %179 = vmatprep.subr.mxu0 0.0
    %180 = vmatpush1.msra.mxu0 %v59
    %181 = vmatprep.subr.mxu0 0.0
    %182 = vmatpush1.msra.mxu0 %v60
    %183 = vmatprep.subr.mxu0 0.0
    %184 = vmatpush1.msra.mxu0 %v61
    %185 = vmatprep.subr.mxu0 0.0
    %186 = vmatpush1.msra.mxu0 %v62
    %187 = vmatprep.subr.mxu0 0.0
    %188 = vmatpush1.msra.mxu0 %v63
    %189 = vmatprep.subr.mxu0 0.0
    %190 = vmatpush1.msra.mxu0 %v64
    %191 = vmatprep.subr.mxu0 0.0
    %192 = vmatpush1.msra.mxu0 %v65
    %193 = vmatprep.subr.mxu0 0.0
    %194 = vmatpush1.msra.mxu0 %v66
    %195 = vmatprep.subr.mxu0 0.0
    %196 = vmatpush1.msra.mxu0 %v67
    %197 = vmatprep.subr.mxu0 0.0
    %198 = vmatpush1.msra.mxu0 %v68
    %199 = vmatprep.subr.mxu0 0.0
    %200 = vmatpush1.msra.mxu0 %v69
    %201 = vmatprep.subr.mxu0 0.0
    %202 = vmatpush1.msra.mxu0 %v70
    %203 = vmatprep.subr.mxu0 0.0
    %204 = vmatpush1.msra.mxu0 %v71
    %205 = vmatprep.subr.mxu0 0.0
    %206 = vmatpush1.msra.mxu0 %v72
    %207 = vmatprep.subr.mxu0 0.0
    %208 = vmatpush1.msra.mxu0 %v73
    %209 = vmatprep.subr.mxu0 0.0
    %210 = vmatpush1.msra.mxu0 %v74
    %211 = vmatprep.subr.mxu0 0.0
    %212 = vmatpush1.msra.mxu0 %v75
    %213 = vmatprep.subr.mxu0 0.0
    %214 = vmatpush1.msra.mxu0 %v76
    %215 = vmatprep.subr.mxu0 0.0
    %216 = vmatpush1.msra.mxu0 %v77
    %217 = vmatprep.subr.mxu0 0.0
    %218 = vmatpush1.msra.mxu0 %v78
    %219 = vmatprep.subr.mxu0 0.0
    %220 = vmatpush1.msra.mxu0 %v79
    %221 = vmatprep.mubr.f32.mxu0 %v42
    %222 = vmatmul.mubr.f32.gmra.mrb[0].mxu0 %v41
    %v223 = vpop.f32.mrb[0].mxu0
    %v224 = vadd.f32 %v151, %v223
    %v225 = vpop.f32.mrb[0].mxu0
    %226 = vdwg.mxu0
    %227 = vmatprep.subr.mxu0 0.0
    %228 = vmatpush1.msra.mxu0 %v80
    %229 = vmatprep.subr.mxu0 0.0
    %230 = vmatpush1.msra.mxu0 %v81
    %231 = vmatprep.subr.mxu0 0.0
    %232 = vmatpush1.msra.mxu0 %v82
    %233 = vmatprep.subr.mxu0 0.0
    %234 = vmatpush1.msra.mxu0 %v83
    %235 = vmatprep.subr.mxu0 0.0
    %236 = vmatpush1.msra.mxu0 %v84
    %237 = vmatprep.subr.mxu0 0.0
    %238 = vmatpush1.msra.mxu0 %v85
    %239 = vmatprep.subr.mxu0 0.0
    %240 = vmatpush1.msra.mxu0 %v86
    %241 = vmatprep.subr.mxu0 0.0
    %242 = vmatpush1.msra.mxu0 %v87
    %243 = vmatprep.subr.mxu0 0.0
    %244 = vmatpush1.msra.mxu0 %v88
    %245 = vmatprep.subr.mxu0 0.0
    %246 = vmatpush1.msra.mxu0 %v89
    %247 = vmatprep.subr.mxu0 0.0
    %248 = vmatpush1.msra.mxu0 %v90
    %249 = vmatprep.subr.mxu0 0.0
    %250 = vmatpush1.msra.mxu0 %v91
    %251 = vmatprep.subr.mxu0 0.0
    %252 = vmatpush1.msra.mxu0 %v92
    %253 = vmatprep.subr.mxu0 0.0
    %254 = vmatpush1.msra.mxu0 %v93
    %255 = vmatprep.subr.mxu0 0.0
    %256 = vmatpush1.msra.mxu0 %v94
    %257 = vmatprep.subr.mxu0 0.0
    %258 = vmatpush1.msra.mxu0 %v95
    %259 = vmatprep.subr.mxu0 0.0
    %260 = vmatpush1.msra.mxu0 %v96
    %261 = vmatprep.subr.mxu0 0.0
    %262 = vmatpush1.msra.mxu0 %v97
    %263 = vmatprep.subr.mxu0 0.0
    %264 = vmatpush1.msra.mxu0 %v98
    %265 = vmatprep.subr.mxu0 0.0
    %266 = vmatpush1.msra.mxu0 %v99
    %267 = vmatprep.subr.mxu0 0.0
    %268 = vmatpush1.msra.mxu0 %v100
    %269 = vmatprep.subr.mxu0 0.0
    %270 = vmatpush1.msra.mxu0 %v101
    %271 = vmatprep.subr.mxu0 0.0
    %272 = vmatpush1.msra.mxu0 %v102
    %273 = vmatprep.subr.mxu0 0.0
    %274 = vmatpush1.msra.mxu0 %v103
    %275 = vmatprep.subr.mxu0 0.0
    %276 = vmatpush1.msra.mxu0 %v104
    %277 = vmatprep.subr.mxu0 0.0
    %278 = vmatpush1.msra.mxu0 %v105
    %279 = vmatprep.subr.mxu0 0.0
    %280 = vmatpush1.msra.mxu0 %v106
    %281 = vmatprep.subr.mxu0 0.0
    %282 = vmatpush1.msra.mxu0 %v107
    %283 = vmatprep.subr.mxu0 0.0
    %284 = vmatpush1.msra.mxu0 %v108
    %285 = vmatprep.subr.mxu0 0.0
    %286 = vmatpush1.msra.mxu0 %v109
    %287 = vmatprep.subr.mxu0 0.0
    %288 = vmatpush1.msra.mxu0 %v110
    %289 = vmatprep.subr.mxu0 0.0
    %290 = vmatpush1.msra.mxu0 %v111
    %291 = vmatprep.mubr.f32.mxu0 %v44
    %292 = vmatmul.mubr.f32.gmra.mrb[0].mxu0 %v43
    %v293 = vpop.f32.mrb[0].mxu0
    %v294 = vadd.f32 %v224, %v293
    %v295 = vpop.f32.mrb[0].mxu0
    %296 = vdwg.mxu0
    %297 = vmatprep.subr.mxu0 0.0
    %298 = vmatpush1.msra.mxu0 %v112
    %299 = vmatprep.subr.mxu0 0.0
    %300 = vmatpush1.msra.mxu0 %v113
    %301 = vmatprep.subr.mxu0 0.0
    %302 = vmatpush1.msra.mxu0 %v114
    %303 = vmatprep.subr.mxu0 0.0
    %304 = vmatpush1.msra.mxu0 %v115
    %305 = vmatprep.subr.mxu0 0.0
    %306 = vmatpush1.msra.mxu0 %v116
    %307 = vmatprep.subr.mxu0 0.0
    %308 = vmatpush1.msra.mxu0 %v117
    %309 = vmatprep.subr.mxu0 0.0
    %310 = vmatpush1.msra.mxu0 %v118
    %311 = vmatprep.subr.mxu0 0.0
    %312 = vmatpush1.msra.mxu0 %v119
    %313 = vmatprep.subr.mxu0 0.0
    %314 = vmatpush1.msra.mxu0 %v120
    %315 = vmatprep.subr.mxu0 0.0
    %316 = vmatpush1.msra.mxu0 %v121
    %317 = vmatprep.subr.mxu0 0.0
    %318 = vmatpush1.msra.mxu0 %v122
    %319 = vmatprep.subr.mxu0 0.0
    %320 = vmatpush1.msra.mxu0 %v123
    %321 = vmatprep.subr.mxu0 0.0
    %322 = vmatpush1.msra.mxu0 %v124
    %323 = vmatprep.subr.mxu0 0.0
    %324 = vmatpush1.msra.mxu0 %v125
    %325 = vmatprep.subr.mxu0 0.0
    %326 = vmatpush1.msra.mxu0 %v126
    %327 = vmatprep.subr.mxu0 0.0
    %328 = vmatpush1.msra.mxu0 %v127
    %329 = vmatprep.subr.mxu0 0.0
    %330 = vmatpush1.msra.mxu0 %v128
    %331 = vmatprep.subr.mxu0 0.0
    %332 = vmatpush1.msra.mxu0 %v129
    %333 = vmatprep.subr.mxu0 0.0
    %334 = vmatpush1.msra.mxu0 %v130
    %335 = vmatprep.subr.mxu0 0.0
    %336 = vmatpush1.msra.mxu0 %v131
    %337 = vmatprep.subr.mxu0 0.0
    %338 = vmatpush1.msra.mxu0 %v132
    %339 = vmatprep.subr.mxu0 0.0
    %340 = vmatpush1.msra.mxu0 %v133
    %341 = vmatprep.subr.mxu0 0.0
    %342 = vmatpush1.msra.mxu0 %v134
    %343 = vmatprep.subr.mxu0 0.0
    %344 = vmatpush1.msra.mxu0 %v135
    %345 = vmatprep.subr.mxu0 0.0
    %346 = vmatpush1.msra.mxu0 %v136
    %347 = vmatprep.subr.mxu0 0.0
    %348 = vmatpush1.msra.mxu0 %v137
    %349 = vmatprep.subr.mxu0 0.0
    %350 = vmatpush1.msra.mxu0 %v138
    %351 = vmatprep.subr.mxu0 0.0
    %352 = vmatpush1.msra.mxu0 %v139
    %353 = vmatprep.subr.mxu0 0.0
    %354 = vmatpush1.msra.mxu0 %v140
    %355 = vmatprep.subr.mxu0 0.0
    %356 = vmatpush1.msra.mxu0 %v141
    %357 = vmatprep.subr.mxu0 0.0
    %358 = vmatpush1.msra.mxu0 %v142
    %359 = vmatprep.subr.mxu0 0.0
    %360 = vmatpush1.msra.mxu0 %v143
    %361 = vmatprep.mubr.f32.mxu0 %v46
    %362 = vmatmul.mubr.f32.gmra.mrb[0].mxu0 %v45
    %v363 = vpop.f32.mrb[0].mxu0
    %v364 = vadd.f32 %v294, %v363
    %v365 = vpop.f32.mrb[0].mxu0
    %366 = vdwg.mxu0
    %367 = vmatprep.subr.mxu0 0.0
    %368 = vmatpush1.msra.mxu0 %v144
    %369 = vmatprep.subr.mxu0 0.0
    %370 = vmatpush1.msra.mxu0 %v145
    %371 = vmatprep.subr.mxu0 0.0
    %372 = vmatpush1.msra.mxu0 0.0
    %373 = vmatprep.subr.mxu0 0.0
    %374 = vmatpush1.msra.mxu0 0.0
    %375 = vmatprep.subr.mxu0 0.0
    %376 = vmatpush1.msra.mxu0 0.0
    %377 = vmatprep.subr.mxu0 0.0
    %378 = vmatpush1.msra.mxu0 0.0
    %379 = vmatprep.subr.mxu0 0.0
    %380 = vmatpush1.msra.mxu0 0.0
    %381 = vmatprep.subr.mxu0 0.0
    %382 = vmatpush1.msra.mxu0 0.0
    %383 = vmatprep.subr.mxu0 0.0
    %384 = vmatpush1.msra.mxu0 0.0
    %385 = vmatprep.subr.mxu0 0.0
    %386 = vmatpush1.msra.mxu0 0.0
    %387 = vmatprep.subr.mxu0 0.0
    %388 = vmatpush1.msra.mxu0 0.0
    %389 = vmatprep.subr.mxu0 0.0
    %390 = vmatpush1.msra.mxu0 0.0
    %391 = vmatprep.subr.mxu0 0.0
    %392 = vmatpush1.msra.mxu0 0.0
    %393 = vmatprep.subr.mxu0 0.0
    %394 = vmatpush1.msra.mxu0 0.0
    %395 = vmatprep.subr.mxu0 0.0
    %396 = vmatpush1.msra.mxu0 0.0
    %397 = vmatprep.subr.mxu0 0.0
    %398 = vmatpush1.msra.mxu0 0.0
    %399 = vmatprep.subr.mxu0 0.0
    %400 = vmatpush1.msra.mxu0 0.0
    %401 = vmatprep.subr.mxu0 0.0
    %402 = vmatpush1.msra.mxu0 0.0
    %403 = vmatprep.subr.mxu0 0.0
    %404 = vmatpush1.msra.mxu0 0.0
    %405 = vmatprep.subr.mxu0 0.0
    %406 = vmatpush1.msra.mxu0 0.0
    %407 = vmatprep.subr.mxu0 0.0
    %408 = vmatpush1.msra.mxu0 0.0
    %409 = vmatprep.subr.mxu0 0.0
    %410 = vmatpush1.msra.mxu0 0.0
    %411 = vmatprep.subr.mxu0 0.0
    %412 = vmatpush1.msra.mxu0 0.0
    %413 = vmatprep.subr.mxu0 0.0
    %414 = vmatpush1.msra.mxu0 0.0
    %415 = vmatprep.subr.mxu0 0.0
    %416 = vmatpush1.msra.mxu0 0.0
    %417 = vmatprep.subr.mxu0 0.0
    %418 = vmatpush1.msra.mxu0 0.0
    %419 = vmatprep.subr.mxu0 0.0
    %420 = vmatpush1.msra.mxu0 0.0
    %421 = vmatprep.subr.mxu0 0.0
    %422 = vmatpush1.msra.mxu0 0.0
    %423 = vmatprep.subr.mxu0 0.0
    %424 = vmatpush1.msra.mxu0 0.0
    %425 = vmatprep.subr.mxu0 0.0
    %426 = vmatpush1.msra.mxu0 0.0
    %427 = vmatprep.subr.mxu0 0.0
    %428 = vmatpush1.msra.mxu0 0.0
    %429 = vmatprep.subr.mxu0 0.0
    %430 = vmatpush1.msra.mxu0 0.0
    %431 = vmatprep.mubr.f32.mxu0 0.0
    %432 = vmatmul.mubr.f32.gmra.mrb[0].mxu0 %v155
    %v433 = vpop.f32.mrb[0].mxu0
    %v434 = vadd.f32 %v364, %v433
    %v435 = vpop.f32.mrb[0].mxu0
    %436 = vdwg.mxu0
    %437 = vmax.xlane.f32.xlu0 %v434
    %v438 = vpop.xlane.xlu0 %437
    %v439 = vsub.f32 %v434, %v438
    %v440 = vmul.f32 %v439, 1.442695
    %v441 = vpow.pop %v440
    %442 = vadd.xlane.f32.xlu0 %v441
    %v443 = vpop.xlane.xlu0 %442
    %v444 = vlog2.pop %v443
    %v445 = vmul.f32 %v444, 0.6931472
    %v446 = vsub.f32 %v439, %v445
    %447 = vst [vmem:[#allocation7] sm:$0xff] %v446
    // Predicated region
    $region22: #{tpu_custom_call.1} parent=1 // pred_check
      _
    $region23: #{tpu_custom_call.1} parent=1 // pred_check_branch
      %449 = sbr.rel (0) target = $region25
    $region24: #{tpu_custom_call.1} parent=1 // pred_region
      %s451 = ssub.s32 128, 128
      %452 = vsyncadd [#allocation4], %s451
      %s454 = sshll.u32 [#allocation7], 4
      %s455 = int_to_ptr.vmem [resolvable:$true] %s454
      %457 = dma.vmem_to_hbm [thread:$0]  %s455, 128, %s3, [#allocation4]
    $region25: #{tpu_custom_call.1} parent=1 // pred_fallthru
      _
    // Predicated region
    $region26: #{tpu_custom_call.1} parent=1 // pred_check
      _
    $region27: #{tpu_custom_call.1} parent=1 // pred_check_branch
      %459 = sbr.rel (0) target = $region29
    $region28: #{tpu_custom_call.1} parent=1 // pred_region
      %460 = dma.done [#allocation4], 128
    $region29: #{tpu_custom_call.1} parent=1 // pred_fallthru
      _
    %461 = vsyncpa [#allocation3], 1
    %462 = vsyncpa [#allocation6], 1
    %463 = vsyncpa [#allocation4], 1

</llo_original>
